<compile_context>
chip_gen: v5e
topology: v5e:2x2
jax: 0.10.0
libtpu: 0.0.40
codegen_flags: <defaults>
</compile_context>

<pallas_src>
import functools

import jax
import jax.numpy as jnp
from jax.experimental import pallas as pl
from jax.experimental.pallas import tpu as pltpu


def _fused_mlp_kernel(x_ref, *refs):
    """Chain of sigmoid(h @ W_l + b_l); intermediates stay in VMEM/vregs."""
    out_ref = refs[-1]
    wb_refs = refs[:-1]
    n_layers = len(wb_refs) // 2

    h = x_ref[...].astype(jnp.float32)
    for l in range(n_layers):
        w = wb_refs[2 * l][...]                            # bf16 (K_l, N_l)
        b = wb_refs[2 * l + 1][...].astype(jnp.float32)    # (1, N_l) broadcasts
        y = jnp.dot(h.astype(w.dtype), w,
                    preferred_element_type=jnp.float32) + b
        # EUP-friendly sigmoid: exp and approx-reciprocal both run on the EUP
        # slot; the clip keeps exp finite for extreme / padded-row pre-acts.
        e = jnp.exp(-jnp.clip(y, -60.0, 60.0))
        h = pl.reciprocal(1.0 + e, approx=True)
    out_ref[...] = h.astype(out_ref.dtype)


def _generation_settings():
    """Per-TPU-generation VMEM budget / tile caps (conservative fallback)."""
    try:
        vmem_cap = int(pltpu.get_tpu_info().vmem_capacity_bytes)
    except Exception:
        vmem_cap = 64 * 1024 * 1024            # assume smallest (v7x-like)
    if vmem_cap >= 96 * 1024 * 1024:           # v5e / v6e: 128 MiB VMEM
        return {"vmem_limit": 64 * 1024 * 1024,
                "budget": 48 * 1024 * 1024,
                "tile_m_cap": 1024}
    return {"vmem_limit": 32 * 1024 * 1024,    # v7x: 64 MiB physical VMEM
            "budget": 20 * 1024 * 1024,
            "tile_m_cap": 512}


def _param_bytes(weights, biases):
    return (sum(int(w.size) * jnp.dtype(w.dtype).itemsize for w in weights)
            + sum(int(b.size) * jnp.dtype(b.dtype).itemsize for b in biases))


def _fused_mlp(x2d, weights, biases, settings):
    """Run a stack of Linear+Sigmoid layers as a single Pallas kernel.

    x2d:     (M, K0) float32
    weights: list of (K_l, N_l) bf16 (already transposed vs. PyTorch)
    biases:  list of (1, N_l) float32
    """
    M, k0 = x2d.shape
    dims = [k0] + [int(w.shape[1]) for w in weights]
    out_dim = dims[-1]
    max_dim = max(dims)

    act_itemsize = jnp.dtype(x2d.dtype).itemsize
    param_bytes = _param_bytes(weights, biases)

    # Pallas double-buffers every input spec (even constant-index params), so
    # account for 2x parameter bytes; per row: double-buffered x/out tiles plus
    # a few f32 intermediate-activation copies.
    per_row_bytes = act_itemsize * 2 * (k0 + out_dim) + 4 * 4 * max_dim
    avail = settings["budget"] - 2 * param_bytes
    tm = avail // max(per_row_bytes, 1)
    tm = int(min(settings["tile_m_cap"], max(8, tm)))
    tm -= tm % 8
    if M <= 8:
        tm = M                                  # tiny batch: one full block
    else:
        # Keep >=2 grid steps so v7x's second TensorCore gets work and there is
        # DMA/compute overlap; harmless on single-TC v5e/v6e.
        half = max(8, (pl.cdiv(M, 2) // 8) * 8)
        tm = max(8, min(tm, half))
    grid = (pl.cdiv(M, tm),)

    # BlockSpecs: activation tiles walk the batch axis; params are resident.
    in_specs = [pl.BlockSpec((tm, k0), lambda i: (i, 0))]
    flat_args = [x2d]
    for w, b in zip(weights, biases):
        kin, nout = int(w.shape[0]), int(w.shape[1])
        in_specs.append(pl.BlockSpec((kin, nout), lambda i: (0, 0)))
        in_specs.append(pl.BlockSpec((1, nout), lambda i: (0, 0)))
        flat_args.append(w)
        flat_args.append(b)
    out_specs = pl.BlockSpec((tm, out_dim), lambda i: (i, 0))

    # Advisory cost estimate for XLA's scheduler.
    flops = sum(2 * M * dims[l] * dims[l + 1] for l in range(len(weights)))
    transcendentals = sum(M * dims[l + 1] for l in range(len(weights)))
    bytes_accessed = (M * k0 + M * out_dim) * act_itemsize + param_bytes
    cost = pl.CostEstimate(flops=flops, transcendentals=transcendentals,
                           bytes_accessed=bytes_accessed)

    return pl.pallas_call(
        _fused_mlp_kernel,
        out_shape=jax.ShapeDtypeStruct((M, out_dim), x2d.dtype),
        grid=grid,
        in_specs=in_specs,
        out_specs=out_specs,
        compiler_params=pltpu.CompilerParams(
            dimension_semantics=("parallel",),
            vmem_limit_bytes=settings["vmem_limit"],
        ),
        cost_estimate=cost,
    )(*flat_args)


def autoencoder_pallas(x2d, weights, biases):
    """All-layers-fused path; streams layer-by-layer if params would blow VMEM."""
    settings = _generation_settings()
    param_bytes = _param_bytes(weights, biases)
    if 2 * param_bytes <= settings["budget"] // 2:
        return _fused_mlp(x2d, weights, biases, settings)
    # Wide MLP: all-resident weights would exceed the VMEM budget (matters most
    # on v7x's 64 MiB) — run one layer per pallas_call instead.
    # TODO(synk): add a K/N-tiled matmul grid for single layers whose weights
    # alone exceed VMEM.
    h = x2d
    for w, b in zip(weights, biases):
        h = _fused_mlp(h, [w], [b], settings)
    return h


def init_autoencoder_params(key, input_size, layers, latent_dim):
    """Deterministic parameter init matching the PyTorch module's layer shapes."""
    def make_linear(key, fan_in, fan_out):
        kw, kb = jax.random.split(key)
        # PyTorch nn.Linear default: U(-1/sqrt(fan_in), 1/sqrt(fan_in))
        bound = 1.0 / jnp.sqrt(jnp.float32(fan_in))
        w = jax.random.uniform(kw, (fan_in, fan_out), jnp.float32, -bound, bound)
        b = jax.random.uniform(kb, (1, fan_out), jnp.float32, -bound, bound)
        return w, b

    params = {"encoder": [], "decoder": []}
    dims_enc = [input_size] + list(layers) + [latent_dim]
    dims_dec = [latent_dim] + list(reversed(layers)) + [input_size]

    for fan_in, fan_out in zip(dims_enc[:-1], dims_enc[1:]):
        key, sub = jax.random.split(key)
        params["encoder"].append(make_linear(sub, fan_in, fan_out))
    for fan_in, fan_out in zip(dims_dec[:-1], dims_dec[1:]):
        key, sub = jax.random.split(key)
        params["decoder"].append(make_linear(sub, fan_in, fan_out))
    return params


@functools.partial(jax.jit, static_argnames=("input_size",))
def autoencoder_forward(params, x, *, input_size):
    """Equivalent of Autoencoder.forward: decoder(encoder(x.view(-1, input_size)))."""
    h = x.reshape(-1, input_size).astype(jnp.float32)
    all_layers = params["encoder"] + params["decoder"]
    weights = [w.astype(jnp.bfloat16) for (w, _) in all_layers]  # MXU-native
    biases = [b for (_, b) in all_layers]                        # f32 (tiny)
    return autoencoder_pallas(h, weights, biases)


def _reference_forward(params, x, input_size):
    h = x.reshape(-1, input_size)
    for w, b in params["encoder"] + params["decoder"]:
        h = jax.nn.sigmoid(h @ w + b)
    return h


if __name__ == "__main__":
    # Small shapes consistent with the module: image-like input flattened to
    # input_size features by forward's x.view(-1, input_size).
    batch = 32
    input_size = 64          # e.g. 8x8 inputs
    layers = [32, 16]
    latent_dim = 2

    key = jax.random.PRNGKey(0)
    kp, kx = jax.random.split(key)
    params = init_autoencoder_params(kp, input_size, layers, latent_dim)
    x = jax.random.normal(kx, (batch, 1, 8, 8), jnp.float32)  # NCHW-like input

    out = autoencoder_forward(params, x, input_size=input_size)
    out = jax.block_until_ready(out)

    ref = _reference_forward(params, x, input_size)
    assert out.shape == (batch, input_size)
    # bf16 weights + approx-EUP sigmoid => relax tolerance vs f32 reference.
    assert jnp.allclose(out, ref, atol=2e-2, rtol=2e-2), float(
        jnp.max(jnp.abs(out - ref)))

    print("KERNEL_OK")
</pallas_src>

<mosaic_0001>
module attributes {stable_mosaic.version = 11 : i64} {
  func.func @_fused_mlp_kernel(%arg0: i32, %arg1: memref<16x64xf32, #tpu.memory_space<vmem>>, %arg2: memref<64x32xbf16, #tpu.memory_space<vmem>>, %arg3: memref<1x32xf32, #tpu.memory_space<vmem>>, %arg4: memref<32x16xbf16, #tpu.memory_space<vmem>>, %arg5: memref<1x16xf32, #tpu.memory_space<vmem>>, %arg6: memref<16x2xbf16, #tpu.memory_space<vmem>>, %arg7: memref<1x2xf32, #tpu.memory_space<vmem>>, %arg8: memref<2x16xbf16, #tpu.memory_space<vmem>>, %arg9: memref<1x16xf32, #tpu.memory_space<vmem>>, %arg10: memref<16x32xbf16, #tpu.memory_space<vmem>>, %arg11: memref<1x32xf32, #tpu.memory_space<vmem>>, %arg12: memref<32x64xbf16, #tpu.memory_space<vmem>>, %arg13: memref<1x64xf32, #tpu.memory_space<vmem>>, %arg14: memref<16x64xf32, #tpu.memory_space<vmem>>) attributes {dimension_semantics = [#tpu.dimension_semantics<parallel>], iteration_bounds = array<i64: 2>, scalar_prefetch = 0 : i64, scratch_operands = 0 : i64, tpu.core_type = #tpu.core_type<tc>, window_params = [{transform_indices = @transform_0, window_bounds = array<i64: 16, 64>}, {pipeline_mode = #tpu.pipeline_mode<synchronous>, transform_indices = @transform_1, window_bounds = array<i64: 64, 32>}, {pipeline_mode = #tpu.pipeline_mode<synchronous>, transform_indices = @transform_2, window_bounds = array<i64: 1, 32>}, {pipeline_mode = #tpu.pipeline_mode<synchronous>, transform_indices = @transform_3, window_bounds = array<i64: 32, 16>}, {pipeline_mode = #tpu.pipeline_mode<synchronous>, transform_indices = @transform_4, window_bounds = array<i64: 1, 16>}, {pipeline_mode = #tpu.pipeline_mode<synchronous>, transform_indices = @transform_5, window_bounds = array<i64: 16, 2>}, {pipeline_mode = #tpu.pipeline_mode<synchronous>, transform_indices = @transform_6, window_bounds = array<i64: 1, 2>}, {pipeline_mode = #tpu.pipeline_mode<synchronous>, transform_indices = @transform_7, window_bounds = array<i64: 2, 16>}, {pipeline_mode = #tpu.pipeline_mode<synchronous>, transform_indices = @transform_8, window_bounds = array<i64: 1, 16>}, {pipeline_mode = #tpu.pipeline_mode<synchronous>, transform_indices = @transform_9, window_bounds = array<i64: 16, 32>}, {pipeline_mode = #tpu.pipeline_mode<synchronous>, transform_indices = @transform_10, window_bounds = array<i64: 1, 32>}, {pipeline_mode = #tpu.pipeline_mode<synchronous>, transform_indices = @transform_11, window_bounds = array<i64: 32, 64>}, {pipeline_mode = #tpu.pipeline_mode<synchronous>, transform_indices = @transform_12, window_bounds = array<i64: 1, 64>}, {transform_indices = @transform_13, window_bounds = array<i64: 16, 64>}]} {
    %c0 = arith.constant 0 : index
    %c0_0 = arith.constant 0 : index
    %0 = vector.load %arg1[%c0, %c0_0] : memref<16x64xf32, #tpu.memory_space<vmem>>, vector<16x64xf32>
    %c0_1 = arith.constant 0 : index
    %c0_2 = arith.constant 0 : index
    %1 = vector.load %arg2[%c0_1, %c0_2] : memref<64x32xbf16, #tpu.memory_space<vmem>>, vector<64x32xbf16>
    %c0_3 = arith.constant 0 : index
    %c0_4 = arith.constant 0 : index
    %2 = vector.load %arg3[%c0_3, %c0_4] : memref<1x32xf32, #tpu.memory_space<vmem>>, vector<1x32xf32>
    %3 = arith.truncf %0 : vector<16x64xf32> to vector<16x64xbf16>
    %cst = arith.constant dense<0.000000e+00> : vector<16x32xf32>
    %4 = tpu.matmul %3, %1, %cst {dimension_numbers = #tpu.dot_dimension_numbers<[1], [0], [0], [1], [0, 0, 1, 1], [], []>} : vector<16x64xbf16>, vector<64x32xbf16>, vector<16x32xf32> -> vector<16x32xf32>
    %5 = vector.broadcast %2 : vector<1x32xf32> to vector<16x32xf32>
    %6 = arith.addf %4, %5 : vector<16x32xf32>
    %cst_5 = arith.constant -6.000000e+01 : f32
    %cst_6 = arith.constant 6.000000e+01 : f32
    %7 = vector.broadcast %cst_5 : f32 to vector<16x32xf32>
    %8 = arith.maximumf %7, %6 : vector<16x32xf32>
    %9 = vector.broadcast %cst_6 : f32 to vector<16x32xf32>
    %10 = arith.minimumf %9, %8 : vector<16x32xf32>
    %cst_7 = arith.constant 0.000000e+00 : f32
    %11 = vector.broadcast %cst_7 : f32 to vector<16x32xf32>
    %12 = arith.subf %11, %10 : vector<16x32xf32>
    %13 = math.exp %12 : vector<16x32xf32>
    %cst_8 = arith.constant 1.000000e+00 : f32
    %14 = vector.broadcast %cst_8 : f32 to vector<16x32xf32>
    %15 = arith.addf %14, %13 : vector<16x32xf32>
    %16 = tpu.reciprocal %15 {approx = true} : vector<16x32xf32> -> vector<16x32xf32>
    %c0_9 = arith.constant 0 : index
    %c0_10 = arith.constant 0 : index
    %17 = vector.load %arg4[%c0_9, %c0_10] : memref<32x16xbf16, #tpu.memory_space<vmem>>, vector<32x16xbf16>
    %c0_11 = arith.constant 0 : index
    %c0_12 = arith.constant 0 : index
    %18 = vector.load %arg5[%c0_11, %c0_12] : memref<1x16xf32, #tpu.memory_space<vmem>>, vector<1x16xf32>
    %19 = arith.truncf %16 : vector<16x32xf32> to vector<16x32xbf16>
    %cst_13 = arith.constant dense<0.000000e+00> : vector<16x16xf32>
    %20 = tpu.matmul %19, %17, %cst_13 {dimension_numbers = #tpu.dot_dimension_numbers<[1], [0], [0], [1], [0, 0, 1, 1], [], []>} : vector<16x32xbf16>, vector<32x16xbf16>, vector<16x16xf32> -> vector<16x16xf32>
    %21 = vector.broadcast %18 : vector<1x16xf32> to vector<16x16xf32>
    %22 = arith.addf %20, %21 : vector<16x16xf32>
    %cst_14 = arith.constant -6.000000e+01 : f32
    %cst_15 = arith.constant 6.000000e+01 : f32
    %23 = vector.broadcast %cst_14 : f32 to vector<16x16xf32>
    %24 = arith.maximumf %23, %22 : vector<16x16xf32>
    %25 = vector.broadcast %cst_15 : f32 to vector<16x16xf32>
    %26 = arith.minimumf %25, %24 : vector<16x16xf32>
    %cst_16 = arith.constant 0.000000e+00 : f32
    %27 = vector.broadcast %cst_16 : f32 to vector<16x16xf32>
    %28 = arith.subf %27, %26 : vector<16x16xf32>
    %29 = math.exp %28 : vector<16x16xf32>
    %cst_17 = arith.constant 1.000000e+00 : f32
    %30 = vector.broadcast %cst_17 : f32 to vector<16x16xf32>
    %31 = arith.addf %30, %29 : vector<16x16xf32>
    %32 = tpu.reciprocal %31 {approx = true} : vector<16x16xf32> -> vector<16x16xf32>
    %c0_18 = arith.constant 0 : index
    %c0_19 = arith.constant 0 : index
    %33 = vector.load %arg6[%c0_18, %c0_19] : memref<16x2xbf16, #tpu.memory_space<vmem>>, vector<16x2xbf16>
    %c0_20 = arith.constant 0 : index
    %c0_21 = arith.constant 0 : index
    %34 = vector.load %arg7[%c0_20, %c0_21] : memref<1x2xf32, #tpu.memory_space<vmem>>, vector<1x2xf32>
    %35 = arith.truncf %32 : vector<16x16xf32> to vector<16x16xbf16>
    %cst_22 = arith.constant dense<0.000000e+00> : vector<16x2xf32>
    %36 = tpu.matmul %35, %33, %cst_22 {dimension_numbers = #tpu.dot_dimension_numbers<[1], [0], [0], [1], [0, 0, 1, 1], [], []>} : vector<16x16xbf16>, vector<16x2xbf16>, vector<16x2xf32> -> vector<16x2xf32>
    %37 = vector.broadcast %34 : vector<1x2xf32> to vector<16x2xf32>
    %38 = arith.addf %36, %37 : vector<16x2xf32>
    %cst_23 = arith.constant -6.000000e+01 : f32
    %cst_24 = arith.constant 6.000000e+01 : f32
    %39 = vector.broadcast %cst_23 : f32 to vector<16x2xf32>
    %40 = arith.maximumf %39, %38 : vector<16x2xf32>
    %41 = vector.broadcast %cst_24 : f32 to vector<16x2xf32>
    %42 = arith.minimumf %41, %40 : vector<16x2xf32>
    %cst_25 = arith.constant 0.000000e+00 : f32
    %43 = vector.broadcast %cst_25 : f32 to vector<16x2xf32>
    %44 = arith.subf %43, %42 : vector<16x2xf32>
    %45 = math.exp %44 : vector<16x2xf32>
    %cst_26 = arith.constant 1.000000e+00 : f32
    %46 = vector.broadcast %cst_26 : f32 to vector<16x2xf32>
    %47 = arith.addf %46, %45 : vector<16x2xf32>
    %48 = tpu.reciprocal %47 {approx = true} : vector<16x2xf32> -> vector<16x2xf32>
    %c0_27 = arith.constant 0 : index
    %c0_28 = arith.constant 0 : index
    %49 = vector.load %arg8[%c0_27, %c0_28] : memref<2x16xbf16, #tpu.memory_space<vmem>>, vector<2x16xbf16>
    %c0_29 = arith.constant 0 : index
    %c0_30 = arith.constant 0 : index
    %50 = vector.load %arg9[%c0_29, %c0_30] : memref<1x16xf32, #tpu.memory_space<vmem>>, vector<1x16xf32>
    %51 = arith.truncf %48 : vector<16x2xf32> to vector<16x2xbf16>
    %cst_31 = arith.constant dense<0.000000e+00> : vector<16x16xf32>
    %52 = tpu.matmul %51, %49, %cst_31 {dimension_numbers = #tpu.dot_dimension_numbers<[1], [0], [0], [1], [0, 0, 1, 1], [], []>} : vector<16x2xbf16>, vector<2x16xbf16>, vector<16x16xf32> -> vector<16x16xf32>
    %53 = vector.broadcast %50 : vector<1x16xf32> to vector<16x16xf32>
    %54 = arith.addf %52, %53 : vector<16x16xf32>
    %cst_32 = arith.constant -6.000000e+01 : f32
    %cst_33 = arith.constant 6.000000e+01 : f32
    %55 = vector.broadcast %cst_32 : f32 to vector<16x16xf32>
    %56 = arith.maximumf %55, %54 : vector<16x16xf32>
    %57 = vector.broadcast %cst_33 : f32 to vector<16x16xf32>
    %58 = arith.minimumf %57, %56 : vector<16x16xf32>
    %cst_34 = arith.constant 0.000000e+00 : f32
    %59 = vector.broadcast %cst_34 : f32 to vector<16x16xf32>
    %60 = arith.subf %59, %58 : vector<16x16xf32>
    %61 = math.exp %60 : vector<16x16xf32>
    %cst_35 = arith.constant 1.000000e+00 : f32
    %62 = vector.broadcast %cst_35 : f32 to vector<16x16xf32>
    %63 = arith.addf %62, %61 : vector<16x16xf32>
    %64 = tpu.reciprocal %63 {approx = true} : vector<16x16xf32> -> vector<16x16xf32>
    %c0_36 = arith.constant 0 : index
    %c0_37 = arith.constant 0 : index
    %65 = vector.load %arg10[%c0_36, %c0_37] : memref<16x32xbf16, #tpu.memory_space<vmem>>, vector<16x32xbf16>
    %c0_38 = arith.constant 0 : index
    %c0_39 = arith.constant 0 : index
    %66 = vector.load %arg11[%c0_38, %c0_39] : memref<1x32xf32, #tpu.memory_space<vmem>>, vector<1x32xf32>
    %67 = arith.truncf %64 : vector<16x16xf32> to vector<16x16xbf16>
    %cst_40 = arith.constant dense<0.000000e+00> : vector<16x32xf32>
    %68 = tpu.matmul %67, %65, %cst_40 {dimension_numbers = #tpu.dot_dimension_numbers<[1], [0], [0], [1], [0, 0, 1, 1], [], []>} : vector<16x16xbf16>, vector<16x32xbf16>, vector<16x32xf32> -> vector<16x32xf32>
    %69 = vector.broadcast %66 : vector<1x32xf32> to vector<16x32xf32>
    %70 = arith.addf %68, %69 : vector<16x32xf32>
    %cst_41 = arith.constant -6.000000e+01 : f32
    %cst_42 = arith.constant 6.000000e+01 : f32
    %71 = vector.broadcast %cst_41 : f32 to vector<16x32xf32>
    %72 = arith.maximumf %71, %70 : vector<16x32xf32>
    %73 = vector.broadcast %cst_42 : f32 to vector<16x32xf32>
    %74 = arith.minimumf %73, %72 : vector<16x32xf32>
    %cst_43 = arith.constant 0.000000e+00 : f32
    %75 = vector.broadcast %cst_43 : f32 to vector<16x32xf32>
    %76 = arith.subf %75, %74 : vector<16x32xf32>
    %77 = math.exp %76 : vector<16x32xf32>
    %cst_44 = arith.constant 1.000000e+00 : f32
    %78 = vector.broadcast %cst_44 : f32 to vector<16x32xf32>
    %79 = arith.addf %78, %77 : vector<16x32xf32>
    %80 = tpu.reciprocal %79 {approx = true} : vector<16x32xf32> -> vector<16x32xf32>
    %c0_45 = arith.constant 0 : index
    %c0_46 = arith.constant 0 : index
    %81 = vector.load %arg12[%c0_45, %c0_46] : memref<32x64xbf16, #tpu.memory_space<vmem>>, vector<32x64xbf16>
    %c0_47 = arith.constant 0 : index
    %c0_48 = arith.constant 0 : index
    %82 = vector.load %arg13[%c0_47, %c0_48] : memref<1x64xf32, #tpu.memory_space<vmem>>, vector<1x64xf32>
    %83 = arith.truncf %80 : vector<16x32xf32> to vector<16x32xbf16>
    %cst_49 = arith.constant dense<0.000000e+00> : vector<16x64xf32>
    %84 = tpu.matmul %83, %81, %cst_49 {dimension_numbers = #tpu.dot_dimension_numbers<[1], [0], [0], [1], [0, 0, 1, 1], [], []>} : vector<16x32xbf16>, vector<32x64xbf16>, vector<16x64xf32> -> vector<16x64xf32>
    %85 = vector.broadcast %82 : vector<1x64xf32> to vector<16x64xf32>
    %86 = arith.addf %84, %85 : vector<16x64xf32>
    %cst_50 = arith.constant -6.000000e+01 : f32
    %cst_51 = arith.constant 6.000000e+01 : f32
    %87 = vector.broadcast %cst_50 : f32 to vector<16x64xf32>
    %88 = arith.maximumf %87, %86 : vector<16x64xf32>
    %89 = vector.broadcast %cst_51 : f32 to vector<16x64xf32>
    %90 = arith.minimumf %89, %88 : vector<16x64xf32>
    %cst_52 = arith.constant 0.000000e+00 : f32
    %91 = vector.broadcast %cst_52 : f32 to vector<16x64xf32>
    %92 = arith.subf %91, %90 : vector<16x64xf32>
    %93 = math.exp %92 : vector<16x64xf32>
    %cst_53 = arith.constant 1.000000e+00 : f32
    %94 = vector.broadcast %cst_53 : f32 to vector<16x64xf32>
    %95 = arith.addf %94, %93 : vector<16x64xf32>
    %96 = tpu.reciprocal %95 {approx = true} : vector<16x64xf32> -> vector<16x64xf32>
    %c0_54 = arith.constant 0 : index
    %c0_55 = arith.constant 0 : index
    %97 = vector.load %arg14[%c0_54, %c0_55] : memref<16x64xf32, #tpu.memory_space<vmem>>, vector<16x64xf32>
    tpu.vector_store %arg14[%c0_54, %c0_55], %96 {strides = array<i32>} : memref<16x64xf32, #tpu.memory_space<vmem>>, vector<16x64xf32>,
    return
  }
  func.func @transform_0(%arg0: i32) -> (i32, i32) {
    %c0_i32 = arith.constant 0 : i32
    %c0_i32_0 = arith.constant 0 : i32
    return %arg0, %c0_i32 : i32, i32
  }
  func.func @transform_1(%arg0: i32) -> (i32, i32) {
    %c0_i32 = arith.constant 0 : i32
    %c0_i32_0 = arith.constant 0 : i32
    %c0_i32_1 = arith.constant 0 : i32
    return %c0_i32, %c0_i32_0 : i32, i32
  }
  func.func @transform_2(%arg0: i32) -> (i32, i32) {
    %c0_i32 = arith.constant 0 : i32
    %c0_i32_0 = arith.constant 0 : i32
    %c0_i32_1 = arith.constant 0 : i32
    return %c0_i32, %c0_i32_0 : i32, i32
  }
  func.func @transform_3(%arg0: i32) -> (i32, i32) {
    %c0_i32 = arith.constant 0 : i32
    %c0_i32_0 = arith.constant 0 : i32
    %c0_i32_1 = arith.constant 0 : i32
    return %c0_i32, %c0_i32_0 : i32, i32
  }
  func.func @transform_4(%arg0: i32) -> (i32, i32) {
    %c0_i32 = arith.constant 0 : i32
    %c0_i32_0 = arith.constant 0 : i32
    %c0_i32_1 = arith.constant 0 : i32
    return %c0_i32, %c0_i32_0 : i32, i32
  }
  func.func @transform_5(%arg0: i32) -> (i32, i32) {
    %c0_i32 = arith.constant 0 : i32
    %c0_i32_0 = arith.constant 0 : i32
    %c0_i32_1 = arith.constant 0 : i32
    return %c0_i32, %c0_i32_0 : i32, i32
  }
  func.func @transform_6(%arg0: i32) -> (i32, i32) {
    %c0_i32 = arith.constant 0 : i32
    %c0_i32_0 = arith.constant 0 : i32
    %c0_i32_1 = arith.constant 0 : i32
    return %c0_i32, %c0_i32_0 : i32, i32
  }
  func.func @transform_7(%arg0: i32) -> (i32, i32) {
    %c0_i32 = arith.constant 0 : i32
    %c0_i32_0 = arith.constant 0 : i32
    %c0_i32_1 = arith.constant 0 : i32
    return %c0_i32, %c0_i32_0 : i32, i32
  }
  func.func @transform_8(%arg0: i32) -> (i32, i32) {
    %c0_i32 = arith.constant 0 : i32
    %c0_i32_0 = arith.constant 0 : i32
    %c0_i32_1 = arith.constant 0 : i32
    return %c0_i32, %c0_i32_0 : i32, i32
  }
  func.func @transform_9(%arg0: i32) -> (i32, i32) {
    %c0_i32 = arith.constant 0 : i32
    %c0_i32_0 = arith.constant 0 : i32
    %c0_i32_1 = arith.constant 0 : i32
    return %c0_i32, %c0_i32_0 : i32, i32
  }
  func.func @transform_10(%arg0: i32) -> (i32, i32) {
    %c0_i32 = arith.constant 0 : i32
    %c0_i32_0 = arith.constant 0 : i32
    %c0_i32_1 = arith.constant 0 : i32
    return %c0_i32, %c0_i32_0 : i32, i32
  }
  func.func @transform_11(%arg0: i32) -> (i32, i32) {
    %c0_i32 = arith.constant 0 : i32
    %c0_i32_0 = arith.constant 0 : i32
    %c0_i32_1 = arith.constant 0 : i32
    return %c0_i32, %c0_i32_0 : i32, i32
  }
  func.func @transform_12(%arg0: i32) -> (i32, i32) {
    %c0_i32 = arith.constant 0 : i32
    %c0_i32_0 = arith.constant 0 : i32
    %c0_i32_1 = arith.constant 0 : i32
    return %c0_i32, %c0_i32_0 : i32, i32
  }
  func.func @transform_13(%arg0: i32) -> (i32, i32) {
    %c0_i32 = arith.constant 0 : i32
    %c0_i32_0 = arith.constant 0 : i32
    return %arg0, %c0_i32 : i32, i32
  }
}

</mosaic_0001>

<llo_original>
// kernel: autoencoder_forward.1
$region0: #{autoencoder_forward.1}
  #allocation0 [shape = 'u32[]', space=smem, size = 0x4, offset = 0x4, fixed_abs, tag = 'smem constant byte address 0x4 - core index']
  #allocation1 [shape = 'u32[72,128]{1,0:T(1,128)}', space=vmem, size = 0x9000, scoped, tag = 'internal scratch']
  %s0 = inlined_call_operand.vmem [shape: f32[32,64], index: 0, kind: input, shape index: {}]
  %s1 = inlined_call_operand.vmem [shape: bf16[64,32], index: 1, kind: input, shape index: {}]
  %s2 = inlined_call_operand.vmem [shape: f32[1,32], index: 2, kind: input, shape index: {}]
  %s3 = inlined_call_operand.vmem [shape: bf16[32,16], index: 3, kind: input, shape index: {}]
  %s4 = inlined_call_operand.vmem [shape: f32[1,16], index: 4, kind: input, shape index: {}]
  %s5 = inlined_call_operand.vmem [shape: bf16[16,2], index: 5, kind: input, shape index: {}]
  %s6 = inlined_call_operand.vmem [shape: f32[1,2], index: 6, kind: input, shape index: {}]
  %s7 = inlined_call_operand.vmem [shape: bf16[2,16], index: 7, kind: input, shape index: {}]
  %s8 = inlined_call_operand.vmem [shape: f32[1,16], index: 8, kind: input, shape index: {}]
  %s9 = inlined_call_operand.vmem [shape: bf16[16,32], index: 9, kind: input, shape index: {}]
  %s10 = inlined_call_operand.vmem [shape: f32[1,32], index: 10, kind: input, shape index: {}]
  %s11 = inlined_call_operand.vmem [shape: bf16[32,64], index: 11, kind: input, shape index: {}]
  %s12 = inlined_call_operand.vmem [shape: f32[1,64], index: 12, kind: input, shape index: {}]
  %s13 = inlined_call_operand.hbm [shape: f32[32,64], index: 13, kind: output, shape index: {}]
  %s14 = sld [smem:[#allocation0]]
  $region85: #{autoencoder_forward.1} parent=0
    _
  %s16 = ssub.s32 1, %s14
  %s17 = scalar_select 0, %s16, %s14
  $region1: #{autoencoder_forward.1} parent=0
    #allocation2 [shape = 'u8[16384]{0}', space=vmem, size = 0x4000, scoped, tag = 'output window, operand 0']
    #allocation3 [shape = 's32[2]{0}', space=sflag, size = 0x8, scoped, tag = 'scoped memory for autoencoder_forward.1']
    %18 = vsyncpa [#allocation3], 0
    %s19 = scalar_lea.sflag [#allocation3], 1
    %20 = vsyncpa %s19, 0
    loop: start=0, step=1, limit=4
    $region2: #{autoencoder_forward.1} parent=1 // loop_pre_header
      _
    $region3: #{autoencoder_forward.1} parent=1 // loop_header
      %s22 = sphi 0, %s26
      %p23 = scmp.ge.s32.totalorder %s22, 4
      %s32 = sphi 0, %s34
      %s35 = sphi 0, %s32
      %s36 = sphi 0, %s35
      %s52 = sphi 0, %s36
      %s56 = sphi 0, %s56
      %s58 = sphi 0, %s56
      %s59 = sphi 0, %s58
      %s73 = sphi 0, %s59
      %s77 = sphi 0, %s77
      %s79 = sphi 0, %s77
      %s80 = sphi 0, %s79
      %s94 = sphi 0, %s80
      %s98 = sphi 0, %s98
      %s100 = sphi 0, %s98
      %s101 = sphi 0, %s100
      %s115 = sphi 0, %s101
      %s119 = sphi 0, %s119
      %s121 = sphi 0, %s119
      %s122 = sphi 0, %s121
      %s136 = sphi 0, %s122
      %s140 = sphi 0, %s140
      %s142 = sphi 0, %s140
      %s143 = sphi 0, %s142
      %s157 = sphi 0, %s143
      %s161 = sphi 0, %s161
      %s163 = sphi 0, %s161
      %s164 = sphi 0, %s163
      %s178 = sphi 0, %s164
      %s182 = sphi 0, %s182
      %s184 = sphi 0, %s182
      %s185 = sphi 0, %s184
      %s199 = sphi 0, %s185
      %s203 = sphi 0, %s203
      %s205 = sphi 0, %s203
      %s206 = sphi 0, %s205
      %s220 = sphi 0, %s206
      %s224 = sphi 0, %s224
      %s226 = sphi 0, %s224
      %s227 = sphi 0, %s226
      %s241 = sphi 0, %s227
      %s245 = sphi 0, %s245
      %s247 = sphi 0, %s245
      %s248 = sphi 0, %s247
      %s262 = sphi 0, %s248
      %s266 = sphi 0, %s266
      %s268 = sphi 0, %s266
      %s269 = sphi 0, %s268
      %s283 = sphi 0, %s269
      %s287 = sphi 0, %s287
      %s289 = sphi 0, %s287
      %s290 = sphi 0, %s289
      %s304 = sphi 0, %s290
      %s310 = sphi 0, %s312
      %s313 = sphi 0, %s310
      %s314 = sphi 0, %s313
      %s330 = sphi 0, %s314
    $region4: #{autoencoder_forward.1} parent=1 // loop_header_branch
      %25 = sbr.rel (%p23) target = $region8
    $region5: #{autoencoder_forward.1} parent=1 // loop_body
      %s27 = ssub.s32 %s22, 1
      %s28 = ssub.s32 %s22, 2
      %s29 = sadd.s32 %s22, 1
      %s30 = ssub.s32 %s22, %s29
      %p31 = scmp.eq.s32.totalorder %s30, 0
      %s33 = sadd.s32 %s32, 1
      %s34 = scalar_select %p31, %s32, %s33
      %p37 = pneg %p31
      %p38 = scmp.eq.s32.totalorder %s22, 1
      %p39 = por %p37, %p38
      %p40 = scmp.ne.s32.totalorder %s32, %s35
      %p41 = scmp.eq.s32.totalorder %s22, 0
      %p42 = por %p40, %p41
      %p43 = scmp.ne.s32.totalorder %s32, %s35
      %p44 = scmp.eq.s32.totalorder %s27, 1
      %p45 = por %p43, %p44
      %p46 = scmp.ne.s32.totalorder %s35, %s36
      %p47 = scmp.eq.s32.totalorder %s27, 0
      %p48 = por %p46, %p47
      %p49 = scmp.ne.s32.totalorder %s35, %s36
      %p50 = scmp.eq.s32.totalorder %s28, 1
      %p51 = por %p49, %p50
      %p53 = scmp.ne.s32.totalorder %s36, %s52
      %p54 = scmp.eq.s32.totalorder %s28, 0
      %p55 = por %p53, %p54
      %s57 = sadd.s32 %s56, 1
      %p60 = scmp.eq.s32.totalorder %s22, 1
      %p61 = scmp.ne.s32.totalorder %s56, %s58
      %p62 = scmp.eq.s32.totalorder %s22, 0
      %p63 = por %p61, %p62
      %p64 = scmp.ne.s32.totalorder %s56, %s58
      %p65 = scmp.eq.s32.totalorder %s27, 1
      %p66 = por %p64, %p65
      %p67 = scmp.ne.s32.totalorder %s58, %s59
      %p68 = scmp.eq.s32.totalorder %s27, 0
      %p69 = por %p67, %p68
      %p70 = scmp.ne.s32.totalorder %s58, %s59
      %p71 = scmp.eq.s32.totalorder %s28, 1
      %p72 = por %p70, %p71
      %p74 = scmp.ne.s32.totalorder %s59, %s73
      %p75 = scmp.eq.s32.totalorder %s28, 0
      %p76 = por %p74, %p75
      %s78 = sadd.s32 %s77, 1
      %p81 = scmp.eq.s32.totalorder %s22, 1
      %p82 = scmp.ne.s32.totalorder %s77, %s79
      %p83 = scmp.eq.s32.totalorder %s22, 0
      %p84 = por %p82, %p83
      %p85 = scmp.ne.s32.totalorder %s77, %s79
      %p86 = scmp.eq.s32.totalorder %s27, 1
      %p87 = por %p85, %p86
      %p88 = scmp.ne.s32.totalorder %s79, %s80
      %p89 = scmp.eq.s32.totalorder %s27, 0
      %p90 = por %p88, %p89
      %p91 = scmp.ne.s32.totalorder %s79, %s80
      %p92 = scmp.eq.s32.totalorder %s28, 1
      %p93 = por %p91, %p92
      %p95 = scmp.ne.s32.totalorder %s80, %s94
      %p96 = scmp.eq.s32.totalorder %s28, 0
      %p97 = por %p95, %p96
      %s99 = sadd.s32 %s98, 1
      %p102 = scmp.eq.s32.totalorder %s22, 1
      %p103 = scmp.ne.s32.totalorder %s98, %s100
      %p104 = scmp.eq.s32.totalorder %s22, 0
      %p105 = por %p103, %p104
      %p106 = scmp.ne.s32.totalorder %s98, %s100
      %p107 = scmp.eq.s32.totalorder %s27, 1
      %p108 = por %p106, %p107
      %p109 = scmp.ne.s32.totalorder %s100, %s101
      %p110 = scmp.eq.s32.totalorder %s27, 0
      %p111 = por %p109, %p110
      %p112 = scmp.ne.s32.totalorder %s100, %s101
      %p113 = scmp.eq.s32.totalorder %s28, 1
      %p114 = por %p112, %p113
      %p116 = scmp.ne.s32.totalorder %s101, %s115
      %p117 = scmp.eq.s32.totalorder %s28, 0
      %p118 = por %p116, %p117
      %s120 = sadd.s32 %s119, 1
      %p123 = scmp.eq.s32.totalorder %s22, 1
      %p124 = scmp.ne.s32.totalorder %s119, %s121
      %p125 = scmp.eq.s32.totalorder %s22, 0
      %p126 = por %p124, %p125
      %p127 = scmp.ne.s32.totalorder %s119, %s121
      %p128 = scmp.eq.s32.totalorder %s27, 1
      %p129 = por %p127, %p128
      %p130 = scmp.ne.s32.totalorder %s121, %s122
      %p131 = scmp.eq.s32.totalorder %s27, 0
      %p132 = por %p130, %p131
      %p133 = scmp.ne.s32.totalorder %s121, %s122
      %p134 = scmp.eq.s32.totalorder %s28, 1
      %p135 = por %p133, %p134
      %p137 = scmp.ne.s32.totalorder %s122, %s136
      %p138 = scmp.eq.s32.totalorder %s28, 0
      %p139 = por %p137, %p138
      %s141 = sadd.s32 %s140, 1
      %p144 = scmp.eq.s32.totalorder %s22, 1
      %p145 = scmp.ne.s32.totalorder %s140, %s142
      %p146 = scmp.eq.s32.totalorder %s22, 0
      %p147 = por %p145, %p146
      %p148 = scmp.ne.s32.totalorder %s140, %s142
      %p149 = scmp.eq.s32.totalorder %s27, 1
      %p150 = por %p148, %p149
      %p151 = scmp.ne.s32.totalorder %s142, %s143
      %p152 = scmp.eq.s32.totalorder %s27, 0
      %p153 = por %p151, %p152
      %p154 = scmp.ne.s32.totalorder %s142, %s143
      %p155 = scmp.eq.s32.totalorder %s28, 1
      %p156 = por %p154, %p155
      %p158 = scmp.ne.s32.totalorder %s143, %s157
      %p159 = scmp.eq.s32.totalorder %s28, 0
      %p160 = por %p158, %p159
      %s162 = sadd.s32 %s161, 1
      %p165 = scmp.eq.s32.totalorder %s22, 1
      %p166 = scmp.ne.s32.totalorder %s161, %s163
      %p167 = scmp.eq.s32.totalorder %s22, 0
      %p168 = por %p166, %p167
      %p169 = scmp.ne.s32.totalorder %s161, %s163
      %p170 = scmp.eq.s32.totalorder %s27, 1
      %p171 = por %p169, %p170
      %p172 = scmp.ne.s32.totalorder %s163, %s164
      %p173 = scmp.eq.s32.totalorder %s27, 0
      %p174 = por %p172, %p173
      %p175 = scmp.ne.s32.totalorder %s163, %s164
      %p176 = scmp.eq.s32.totalorder %s28, 1
      %p177 = por %p175, %p176
      %p179 = scmp.ne.s32.totalorder %s164, %s178
      %p180 = scmp.eq.s32.totalorder %s28, 0
      %p181 = por %p179, %p180
      %s183 = sadd.s32 %s182, 1
      %p186 = scmp.eq.s32.totalorder %s22, 1
      %p187 = scmp.ne.s32.totalorder %s182, %s184
      %p188 = scmp.eq.s32.totalorder %s22, 0
      %p189 = por %p187, %p188
      %p190 = scmp.ne.s32.totalorder %s182, %s184
      %p191 = scmp.eq.s32.totalorder %s27, 1
      %p192 = por %p190, %p191
      %p193 = scmp.ne.s32.totalorder %s184, %s185
      %p194 = scmp.eq.s32.totalorder %s27, 0
      %p195 = por %p193, %p194
      %p196 = scmp.ne.s32.totalorder %s184, %s185
      %p197 = scmp.eq.s32.totalorder %s28, 1
      %p198 = por %p196, %p197
      %p200 = scmp.ne.s32.totalorder %s185, %s199
      %p201 = scmp.eq.s32.totalorder %s28, 0
      %p202 = por %p200, %p201
      %s204 = sadd.s32 %s203, 1
      %p207 = scmp.eq.s32.totalorder %s22, 1
      %p208 = scmp.ne.s32.totalorder %s203, %s205
      %p209 = scmp.eq.s32.totalorder %s22, 0
      %p210 = por %p208, %p209
      %p211 = scmp.ne.s32.totalorder %s203, %s205
      %p212 = scmp.eq.s32.totalorder %s27, 1
      %p213 = por %p211, %p212
      %p214 = scmp.ne.s32.totalorder %s205, %s206
      %p215 = scmp.eq.s32.totalorder %s27, 0
      %p216 = por %p214, %p215
      %p217 = scmp.ne.s32.totalorder %s205, %s206
      %p218 = scmp.eq.s32.totalorder %s28, 1
      %p219 = por %p217, %p218
      %p221 = scmp.ne.s32.totalorder %s206, %s220
      %p222 = scmp.eq.s32.totalorder %s28, 0
      %p223 = por %p221, %p222
      %s225 = sadd.s32 %s224, 1
      %p228 = scmp.eq.s32.totalorder %s22, 1
      %p229 = scmp.ne.s32.totalorder %s224, %s226
      %p230 = scmp.eq.s32.totalorder %s22, 0
      %p231 = por %p229, %p230
      %p232 = scmp.ne.s32.totalorder %s224, %s226
      %p233 = scmp.eq.s32.totalorder %s27, 1
      %p234 = por %p232, %p233
      %p235 = scmp.ne.s32.totalorder %s226, %s227
      %p236 = scmp.eq.s32.totalorder %s27, 0
      %p237 = por %p235, %p236
      %p238 = scmp.ne.s32.totalorder %s226, %s227
      %p239 = scmp.eq.s32.totalorder %s28, 1
      %p240 = por %p238, %p239
      %p242 = scmp.ne.s32.totalorder %s227, %s241
      %p243 = scmp.eq.s32.totalorder %s28, 0
      %p244 = por %p242, %p243
      %s246 = sadd.s32 %s245, 1
      %p249 = scmp.eq.s32.totalorder %s22, 1
      %p250 = scmp.ne.s32.totalorder %s245, %s247
      %p251 = scmp.eq.s32.totalorder %s22, 0
      %p252 = por %p250, %p251
      %p253 = scmp.ne.s32.totalorder %s245, %s247
      %p254 = scmp.eq.s32.totalorder %s27, 1
      %p255 = por %p253, %p254
      %p256 = scmp.ne.s32.totalorder %s247, %s248
      %p257 = scmp.eq.s32.totalorder %s27, 0
      %p258 = por %p256, %p257
      %p259 = scmp.ne.s32.totalorder %s247, %s248
      %p260 = scmp.eq.s32.totalorder %s28, 1
      %p261 = por %p259, %p260
      %p263 = scmp.ne.s32.totalorder %s248, %s262
      %p264 = scmp.eq.s32.totalorder %s28, 0
      %p265 = por %p263, %p264
      %s267 = sadd.s32 %s266, 1
      %p270 = scmp.eq.s32.totalorder %s22, 1
      %p271 = scmp.ne.s32.totalorder %s266, %s268
      %p272 = scmp.eq.s32.totalorder %s22, 0
      %p273 = por %p271, %p272
      %p274 = scmp.ne.s32.totalorder %s266, %s268
      %p275 = scmp.eq.s32.totalorder %s27, 1
      %p276 = por %p274, %p275
      %p277 = scmp.ne.s32.totalorder %s268, %s269
      %p278 = scmp.eq.s32.totalorder %s27, 0
      %p279 = por %p277, %p278
      %p280 = scmp.ne.s32.totalorder %s268, %s269
      %p281 = scmp.eq.s32.totalorder %s28, 1
      %p282 = por %p280, %p281
      %p284 = scmp.ne.s32.totalorder %s269, %s283
      %p285 = scmp.eq.s32.totalorder %s28, 0
      %p286 = por %p284, %p285
      %s288 = sadd.s32 %s287, 1
      %p291 = scmp.eq.s32.totalorder %s22, 1
      %p292 = scmp.ne.s32.totalorder %s287, %s289
      %p293 = scmp.eq.s32.totalorder %s22, 0
      %p294 = por %p292, %p293
      %p295 = scmp.ne.s32.totalorder %s287, %s289
      %p296 = scmp.eq.s32.totalorder %s27, 1
      %p297 = por %p295, %p296
      %p298 = scmp.ne.s32.totalorder %s289, %s290
      %p299 = scmp.eq.s32.totalorder %s27, 0
      %p300 = por %p298, %p299
      %p301 = scmp.ne.s32.totalorder %s289, %s290
      %p302 = scmp.eq.s32.totalorder %s28, 1
      %p303 = por %p301, %p302
      %p305 = scmp.ne.s32.totalorder %s290, %s304
      %p306 = scmp.eq.s32.totalorder %s28, 0
      %p307 = por %p305, %p306
      %s308 = ssub.s32 %s22, %s29
      %p309 = scmp.eq.s32.totalorder %s308, 0
      %s311 = sadd.s32 %s310, 1
      %s312 = scalar_select %p309, %s310, %s311
      %p315 = pneg %p309
      %p316 = scmp.eq.s32.totalorder %s22, 1
      %p317 = por %p315, %p316
      %p318 = scmp.ne.s32.totalorder %s310, %s313
      %p319 = scmp.eq.s32.totalorder %s22, 0
      %p320 = por %p318, %p319
      %p321 = scmp.ne.s32.totalorder %s310, %s313
      %p322 = scmp.eq.s32.totalorder %s27, 1
      %p323 = por %p321, %p322
      %p324 = scmp.ne.s32.totalorder %s313, %s314
      %p325 = scmp.eq.s32.totalorder %s27, 0
      %p326 = por %p324, %p325
      %p327 = scmp.ne.s32.totalorder %s313, %s314
      %p328 = scmp.eq.s32.totalorder %s28, 1
      %p329 = por %p327, %p328
      %p331 = scmp.ne.s32.totalorder %s314, %s330
      %p332 = scmp.eq.s32.totalorder %s28, 0
      %p333 = por %p331, %p332
      %p334 = scmp.le.s32.totalorder 1, %s22
      %p335 = scmp.lt.s32.totalorder %s22, 3
      %p336 = pnand %p334, %p335
      %p337 = pneg %p336
      // Predicated region
      $region9: #{autoencoder_forward.1} parent=5 // pred_check
        _
      $region10: #{autoencoder_forward.1} parent=5 // pred_check_branch
        %339 = sbr.rel (%p336) target = $region12
      $region11: #{autoencoder_forward.1} parent=5 // pred_region
        %s340 = ssub.s32 %s22, 1
        // Predicated region
        $region13: #{autoencoder_forward.1} parent=11 // pred_check
          %p341 = pneg %p69
        $region14: #{autoencoder_forward.1} parent=11 // pred_check_branch
          %343 = sbr.rel (%p341) target = $region16
        $region15: #{autoencoder_forward.1} parent=11 // pred_region
          _
        $region16: #{autoencoder_forward.1} parent=11 // pred_fallthru
          _
        // Predicated region
        $region17: #{autoencoder_forward.1} parent=11 // pred_check
          %p344 = pneg %p90
        $region18: #{autoencoder_forward.1} parent=11 // pred_check_branch
          %346 = sbr.rel (%p344) target = $region20
        $region19: #{autoencoder_forward.1} parent=11 // pred_region
          _
        $region20: #{autoencoder_forward.1} parent=11 // pred_fallthru
          _
        // Predicated region
        $region21: #{autoencoder_forward.1} parent=11 // pred_check
          %p347 = pneg %p111
        $region22: #{autoencoder_forward.1} parent=11 // pred_check_branch
          %349 = sbr.rel (%p347) target = $region24
        $region23: #{autoencoder_forward.1} parent=11 // pred_region
          _
        $region24: #{autoencoder_forward.1} parent=11 // pred_fallthru
          _
        // Predicated region
        $region25: #{autoencoder_forward.1} parent=11 // pred_check
          %p350 = pneg %p132
        $region26: #{autoencoder_forward.1} parent=11 // pred_check_branch
          %352 = sbr.rel (%p350) target = $region28
        $region27: #{autoencoder_forward.1} parent=11 // pred_region
          _
        $region28: #{autoencoder_forward.1} parent=11 // pred_fallthru
          _
        // Predicated region
        $region29: #{autoencoder_forward.1} parent=11 // pred_check
          %p353 = pneg %p153
        $region30: #{autoencoder_forward.1} parent=11 // pred_check_branch
          %355 = sbr.rel (%p353) target = $region32
        $region31: #{autoencoder_forward.1} parent=11 // pred_region
          _
        $region32: #{autoencoder_forward.1} parent=11 // pred_fallthru
          _
        // Predicated region
        $region33: #{autoencoder_forward.1} parent=11 // pred_check
          %p356 = pneg %p174
        $region34: #{autoencoder_forward.1} parent=11 // pred_check_branch
          %358 = sbr.rel (%p356) target = $region36
        $region35: #{autoencoder_forward.1} parent=11 // pred_region
          _
        $region36: #{autoencoder_forward.1} parent=11 // pred_fallthru
          _
        // Predicated region
        $region37: #{autoencoder_forward.1} parent=11 // pred_check
          %p359 = pneg %p195
        $region38: #{autoencoder_forward.1} parent=11 // pred_check_branch
          %361 = sbr.rel (%p359) target = $region40
        $region39: #{autoencoder_forward.1} parent=11 // pred_region
          _
        $region40: #{autoencoder_forward.1} parent=11 // pred_fallthru
          _
        // Predicated region
        $region41: #{autoencoder_forward.1} parent=11 // pred_check
          %p362 = pneg %p216
        $region42: #{autoencoder_forward.1} parent=11 // pred_check_branch
          %364 = sbr.rel (%p362) target = $region44
        $region43: #{autoencoder_forward.1} parent=11 // pred_region
          _
        $region44: #{autoencoder_forward.1} parent=11 // pred_fallthru
          _
        // Predicated region
        $region45: #{autoencoder_forward.1} parent=11 // pred_check
          %p365 = pneg %p237
        $region46: #{autoencoder_forward.1} parent=11 // pred_check_branch
          %367 = sbr.rel (%p365) target = $region48
        $region47: #{autoencoder_forward.1} parent=11 // pred_region
          _
        $region48: #{autoencoder_forward.1} parent=11 // pred_fallthru
          _
        // Predicated region
        $region49: #{autoencoder_forward.1} parent=11 // pred_check
          %p368 = pneg %p258
        $region50: #{autoencoder_forward.1} parent=11 // pred_check_branch
          %370 = sbr.rel (%p368) target = $region52
        $region51: #{autoencoder_forward.1} parent=11 // pred_region
          _
        $region52: #{autoencoder_forward.1} parent=11 // pred_fallthru
          _
        // Predicated region
        $region53: #{autoencoder_forward.1} parent=11 // pred_check
          %p371 = pneg %p279
        $region54: #{autoencoder_forward.1} parent=11 // pred_check_branch
          %373 = sbr.rel (%p371) target = $region56
        $region55: #{autoencoder_forward.1} parent=11 // pred_region
          _
        $region56: #{autoencoder_forward.1} parent=11 // pred_fallthru
          _
        // Predicated region
        $region57: #{autoencoder_forward.1} parent=11 // pred_check
          %p374 = pneg %p300
        $region58: #{autoencoder_forward.1} parent=11 // pred_check_branch
          %376 = sbr.rel (%p374) target = $region60
        $region59: #{autoencoder_forward.1} parent=11 // pred_region
          _
        $region60: #{autoencoder_forward.1} parent=11 // pred_fallthru
          _
      $region12: #{autoencoder_forward.1} parent=5 // pred_fallthru
        _
      %p377 = scmp.lt.s32.totalorder %s22, 2
      // Predicated region
      $region61: #{autoencoder_forward.1} parent=5 // pred_check
        %p378 = pneg %p377
      $region62: #{autoencoder_forward.1} parent=5 // pred_check_branch
        %380 = sbr.rel (%p378) target = $region64
      $region63: #{autoencoder_forward.1} parent=5 // pred_region
        // Predicated region
        $region65: #{autoencoder_forward.1} parent=63 // pred_check
          %p381 = pneg %p42
        $region66: #{autoencoder_forward.1} parent=63 // pred_check_branch
          %383 = sbr.rel (%p381) target = $region68
        $region67: #{autoencoder_forward.1} parent=63 // pred_region
          %s384 = smul.u32 2, %s22
          %p385 = scmp.lt.s32.totalorder %s384, 3
          %s386 = scalar_select %p385, %s384, 3
          %s387 = smul.addr %s386, 8
          %s388 = scalar_lea.vmem %s0, %s387
          %s389 = smul.u32 2, %s22
        $region68: #{autoencoder_forward.1} parent=63 // pred_fallthru
          _
      $region64: #{autoencoder_forward.1} parent=5 // pred_fallthru
        _
      %p390 = scmp.le.s32.totalorder 1, %s22
      %p391 = scmp.lt.s32.totalorder %s22, 3
      %p392 = pnand %p390, %p391
      %p393 = pneg %p392
      // Predicated region
      $region69: #{autoencoder_forward.1} parent=5 // pred_check
        _
      $region70: #{autoencoder_forward.1} parent=5 // pred_check_branch
        %395 = sbr.rel (%p392) target = $region72
      $region71: #{autoencoder_forward.1} parent=5 // pred_region
        %s396 = ssub.s32 %s22, 1
        %s397 = smul.u32 2, %s27
        %p398 = scmp.lt.s32.totalorder %s397, 3
        %s399 = scalar_select %p398, %s397, 3
        %s400 = smul.addr %s399, 8
        %s401 = scalar_lea.vmem %s0, %s400
        %p402 = pneg %p48
        %p403 = pneg %p45
        %p404 = pneg %p69
        %p405 = pneg %p66
        %p406 = pneg %p90
        %p407 = pneg %p87
        %p408 = pneg %p111
        %p409 = pneg %p108
        %p410 = pneg %p132
        %p411 = pneg %p129
        %p412 = pneg %p153
        %p413 = pneg %p150
        %p414 = pneg %p174
        %p415 = pneg %p171
        %p416 = pneg %p195
        %p417 = pneg %p192
        %p418 = pneg %p216
        %p419 = pneg %p213
        %p420 = pneg %p237
        %p421 = pneg %p234
        %p422 = pneg %p258
        %p423 = pneg %p255
        %p424 = pneg %p279
        %p425 = pneg %p276
        %p426 = pneg %p300
        %p427 = pneg %p297
        %p428 = pneg %p326
        %p429 = pneg %p323
        %s430 = sand.u32 %s313, 1
        %s431 = scalar_lea.sflag [#allocation3], %s430
        %s432 = sand.u32 %s313, 1
        %s433 = smul.addr %s432, 16
        %s434 = scalar_lea.vmem [#allocation2], %s433
        %s435 = smul.u32 2, %s27
        %p436 = scmp.lt.s32.totalorder %s435, 3
        %s437 = scalar_select %p436, %s435, 3
        %s438 = smul.addr %s437, 8
        %s439 = scalar_lea.vmem %s0, %s438
        %s440 = smul.u32 2, %s27
        %s441 = smul.u32 2, %s27
        %v443 = vld [vmem:[%s439] sm:$0xff]
        %v444 = vld [vmem:[%s439 + $0x8] sm:$0xff]
        %v445 = vld [vmem:[%s1] sm:$0xf]
        %v446 = vld [vmem:[%s1 + $0x4] sm:$0xf]
        %v447 = vld [vmem:[%s1 + $0x8] sm:$0xf]
        %v448 = vld [vmem:[%s1 + $0xc] sm:$0xf]
        %v449 = vld [vmem:[%s1 + $0x10] sm:$0xf]
        %v450 = vld [vmem:[%s1 + $0x14] sm:$0xf]
        %v451 = vld [vmem:[%s1 + $0x18] sm:$0xf]
        %v452 = vld [vmem:[%s1 + $0x1c] sm:$0xf]
        %v453 = vld [vmem:[%s2] sm:$0x1]
        %v454 = vpack.c.bf16 %v444, %v443
        %v456 = vperm.slane %v453, 0
        %v466 = vunpack.c.l.b16 %v445
        %v467 = vunpack.c.l.b16 %v446
        %v468 = vunpack.c.l.b16 %v447
        %v469 = vunpack.c.l.b16 %v448
        %v470 = vunpack.c.l.b16 %v449
        %v471 = vunpack.c.l.b16 %v450
        %v472 = vunpack.c.l.b16 %v451
        %v473 = vunpack.c.l.b16 %v452
        %v474 = vpack.c.b16 %v467, %v466
        %v475 = vpack.c.b16 %v469, %v468
        %v476 = vpack.c.b16 %v471, %v470
        %v477 = vpack.c.b16 %v473, %v472
        %vm482 = vcmask 523264
        %v484 = vsel %vm482, %v454, 0
        %486 = vmatpush.bf16.msra.mxu0 0
        %487 = vmatpush.bf16.msra.mxu0 0
        %488 = vmatpush.bf16.msra.mxu0 0
        %489 = vmatpush.bf16.msra.mxu0 0
        %490 = vmatpush.bf16.msra.mxu0 %v477
        %491 = vmatpush.bf16.msra.mxu0 %v476
        %492 = vmatpush.bf16.msra.mxu0 %v475
        %493 = vmatpush.bf16.msra.mxu0 %v474
        %494 = vmatmul.bf16.gmra.mxu0 %v484
        %v495 = vpop.f32.mrf.mxu0
        %v496 = vadd.f32 %v456, %v495
        %v497 = vpop.f32.mrf.mxu0
        %v498 = vadd.f32 %v456, %v497
        %499 = vdwg.mxu0
        %v500 = vmax.f32 %v496, -60.0
        %v501 = vmax.f32 %v498, -60.0
        %v502 = vmin.f32 %v500, 60.0
        %v503 = vmin.f32 %v501, 60.0
        %v504 = vsub.f32 0.0, %v502
        %v505 = vsub.f32 0.0, %v503
        %v506 = vmul.f32 %v504, 1.442695
        %v507 = vpow.pop %v506
        %v508 = vmul.f32 %v505, 1.442695
        %v509 = vpow.pop %v508
        %v510 = vadd.f32 %v507, 1.0
        %v511 = vadd.f32 %v509, 1.0
        %v512 = vrcp.pop %v510
        %v513 = vrcp.pop %v511
        %v514 = vld [vmem:[%s3] sm:$0xf]
        %v515 = vld [vmem:[%s3 + $0x4] sm:$0xf]
        %v516 = vld [vmem:[%s3 + $0x8] sm:$0xf]
        %v517 = vld [vmem:[%s3 + $0xc] sm:$0xf]
        %v518 = vld [vmem:[%s4] sm:$0x1]
        %v519 = vpack.c.bf16 %v513, %v512
        %v521 = vperm.slane %v518, 0
        %v527 = vunpack.c.l.b16 %v514
        %v528 = vunpack.c.l.b16 %v515
        %v529 = vunpack.c.l.b16 %v516
        %v530 = vunpack.c.l.b16 %v517
        %v531 = vpack.c.b16 %v528, %v527
        %v532 = vpack.c.b16 %v530, %v529
        %vm535 = vcmask 261120
        %v537 = vsel %vm535, %v519, 0
        %539 = vmatpush.bf16.msra.mxu0 0
        %540 = vmatpush.bf16.msra.mxu0 0
        %541 = vmatpush.bf16.msra.mxu0 0
        %542 = vmatpush.bf16.msra.mxu0 0
        %543 = vmatpush.bf16.msra.mxu0 0
        %544 = vmatpush.bf16.msra.mxu0 0
        %545 = vmatpush.bf16.msra.mxu0 %v532
        %546 = vmatpush.bf16.msra.mxu0 %v531
        %547 = vmatmul.bf16.gmra.mxu0 %v537
        %v548 = vpop.f32.mrf.mxu0
        %v549 = vadd.f32 %v521, %v548
        %v550 = vpop.f32.mrf.mxu0
        %v551 = vadd.f32 %v521, %v550
        %552 = vdwg.mxu0
        %v553 = vmax.f32 %v549, -60.0
        %v554 = vmax.f32 %v551, -60.0
        %v555 = vmin.f32 %v553, 60.0
        %v556 = vmin.f32 %v554, 60.0
        %v557 = vsub.f32 0.0, %v555
        %v558 = vsub.f32 0.0, %v556
        %v559 = vmul.f32 %v557, 1.442695
        %v560 = vpow.pop %v559
        %v561 = vmul.f32 %v558, 1.442695
        %v562 = vpow.pop %v561
        %v563 = vadd.f32 %v560, 1.0
        %v564 = vadd.f32 %v562, 1.0
        %v565 = vrcp.pop %v563
        %v566 = vrcp.pop %v564
        %v567 = vld [vmem:[%s5] sm:$0xf]
        %v568 = vld [vmem:[%s5 + $0x4] sm:$0xf]
        %v569 = vld [vmem:[%s6] sm:$0x1]
        %v570 = vpack.c.bf16 %v566, %v565
        %v572 = vperm.slane %v569, 0
        %v576 = vunpack.c.l.b16 %v567
        %v577 = vunpack.c.l.b16 %v568
        %v578 = vpack.c.b16 %v577, %v576
        %vm580 = vcmask 130048
        %v582 = vsel %vm580, %v570, 0
        %584 = vmatpush.bf16.msra.mxu0 0
        %585 = vmatpush.bf16.msra.mxu0 0
        %586 = vmatpush.bf16.msra.mxu0 0
        %587 = vmatpush.bf16.msra.mxu0 0
        %588 = vmatpush.bf16.msra.mxu0 0
        %589 = vmatpush.bf16.msra.mxu0 0
        %590 = vmatpush.bf16.msra.mxu0 0
        %591 = vmatpush.bf16.msra.mxu0 %v578
        %592 = vmatmul.bf16.gmra.mxu0 %v582
        %v593 = vpop.f32.mrf.mxu0
        %v594 = vadd.f32 %v572, %v593
        %v595 = vpop.f32.mrf.mxu0
        %v596 = vadd.f32 %v572, %v595
        %597 = vdwg.mxu0
        %v598 = vmax.f32 %v594, -60.0
        %v599 = vmax.f32 %v596, -60.0
        %v600 = vmin.f32 %v598, 60.0
        %v601 = vmin.f32 %v599, 60.0
        %v602 = vsub.f32 0.0, %v600
        %v603 = vsub.f32 0.0, %v601
        %v604 = vmul.f32 %v602, 1.442695
        %v605 = vpow.pop %v604
        %v606 = vmul.f32 %v603, 1.442695
        %v607 = vpow.pop %v606
        %v608 = vadd.f32 %v605, 1.0
        %v609 = vadd.f32 %v607, 1.0
        %v610 = vrcp.pop %v608
        %v611 = vrcp.pop %v609
        %v612 = vld [vmem:[%s7] sm:$0x1]
        %v613 = vld [vmem:[%s8] sm:$0x1]
        %v614 = vpack.c.bf16 %v611, %v610
        %v616 = vperm.slane %v613, 0
        %vm618 = vcmask 15360
        %v620 = vsel %vm618, %v614, 0
        %vm622 = vcmask 1040384
        %v624 = vsel %vm622, %v612, 0
        %626 = vmatpush.bf16.msra.mxu0 0
        %627 = vmatpush.bf16.msra.mxu0 0
        %628 = vmatpush.bf16.msra.mxu0 0
        %629 = vmatpush.bf16.msra.mxu0 0
        %630 = vmatpush.bf16.msra.mxu0 0
        %631 = vmatpush.bf16.msra.mxu0 0
        %632 = vmatpush.bf16.msra.mxu0 0
        %633 = vmatpush.bf16.msra.mxu0 %v624
        %634 = vmatmul.bf16.gmra.mxu0 %v620
        %v635 = vpop.f32.mrf.mxu0
        %v636 = vadd.f32 %v616, %v635
        %v637 = vpop.f32.mrf.mxu0
        %v638 = vadd.f32 %v616, %v637
        %639 = vdwg.mxu0
        %v640 = vmax.f32 %v636, -60.0
        %v641 = vmax.f32 %v638, -60.0
        %v642 = vmin.f32 %v640, 60.0
        %v643 = vmin.f32 %v641, 60.0
        %v644 = vsub.f32 0.0, %v642
        %v645 = vsub.f32 0.0, %v643
        %v646 = vmul.f32 %v644, 1.442695
        %v647 = vpow.pop %v646
        %v648 = vmul.f32 %v645, 1.442695
        %v649 = vpow.pop %v648
        %v650 = vadd.f32 %v647, 1.0
        %v651 = vadd.f32 %v649, 1.0
        %v652 = vrcp.pop %v650
        %v653 = vrcp.pop %v651
        %v654 = vld [vmem:[%s9] sm:$0xf]
        %v655 = vld [vmem:[%s9 + $0x4] sm:$0xf]
        %v656 = vld [vmem:[%s10] sm:$0x1]
        %v657 = vpack.c.bf16 %v653, %v652
        %v659 = vperm.slane %v656, 0
        %v663 = vunpack.c.l.b16 %v654
        %v664 = vunpack.c.l.b16 %v655
        %v665 = vpack.c.b16 %v664, %v663
        %v668 = vsel %vm580, %v657, 0
        %670 = vmatpush.bf16.msra.mxu0 0
        %671 = vmatpush.bf16.msra.mxu0 0
        %672 = vmatpush.bf16.msra.mxu0 0
        %673 = vmatpush.bf16.msra.mxu0 0
        %674 = vmatpush.bf16.msra.mxu0 0
        %675 = vmatpush.bf16.msra.mxu0 0
        %676 = vmatpush.bf16.msra.mxu0 0
        %677 = vmatpush.bf16.msra.mxu0 %v665
        %678 = vmatmul.bf16.gmra.mxu0 %v668
        %v679 = vpop.f32.mrf.mxu0
        %v680 = vadd.f32 %v659, %v679
        %v681 = vpop.f32.mrf.mxu0
        %v682 = vadd.f32 %v659, %v681
        %683 = vdwg.mxu0
        %v684 = vmax.f32 %v680, -60.0
        %v685 = vmax.f32 %v682, -60.0
        %v686 = vmin.f32 %v684, 60.0
        %v687 = vmin.f32 %v685, 60.0
        %v688 = vsub.f32 0.0, %v686
        %v689 = vsub.f32 0.0, %v687
        %v690 = vmul.f32 %v688, 1.442695
        %v691 = vpow.pop %v690
        %v692 = vmul.f32 %v689, 1.442695
        %v693 = vpow.pop %v692
        %v694 = vadd.f32 %v691, 1.0
        %v695 = vadd.f32 %v693, 1.0
        %v696 = vrcp.pop %v694
        %v697 = vrcp.pop %v695
        %v698 = vld [vmem:[%s11] sm:$0xf]
        %v699 = vld [vmem:[%s11 + $0x4] sm:$0xf]
        %v700 = vld [vmem:[%s11 + $0x8] sm:$0xf]
        %v701 = vld [vmem:[%s11 + $0xc] sm:$0xf]
        %v702 = vld [vmem:[%s12] sm:$0x1]
        %v703 = vpack.c.bf16 %v697, %v696
        %v705 = vperm.slane %v702, 0
        %v711 = vunpack.c.l.b16 %v698
        %v712 = vunpack.c.l.b16 %v699
        %v713 = vunpack.c.l.b16 %v700
        %v714 = vunpack.c.l.b16 %v701
        %v715 = vpack.c.b16 %v712, %v711
        %v716 = vpack.c.b16 %v714, %v713
        %v720 = vsel %vm535, %v703, 0
        %722 = vmatpush.bf16.msra.mxu0 0
        %723 = vmatpush.bf16.msra.mxu0 0
        %724 = vmatpush.bf16.msra.mxu0 0
        %725 = vmatpush.bf16.msra.mxu0 0
        %726 = vmatpush.bf16.msra.mxu0 0
        %727 = vmatpush.bf16.msra.mxu0 0
        %728 = vmatpush.bf16.msra.mxu0 %v716
        %729 = vmatpush.bf16.msra.mxu0 %v715
        %730 = vmatmul.bf16.gmra.mxu0 %v720
        %v731 = vpop.f32.mrf.mxu0
        %v732 = vadd.f32 %v705, %v731
        %v733 = vpop.f32.mrf.mxu0
        %v734 = vadd.f32 %v705, %v733
        %735 = vdwg.mxu0
        %v736 = vmax.f32 %v732, -60.0
        %v737 = vmax.f32 %v734, -60.0
        %v738 = vmin.f32 %v736, 60.0
        %v739 = vmin.f32 %v737, 60.0
        %v740 = vsub.f32 0.0, %v738
        %v741 = vsub.f32 0.0, %v739
        %v742 = vmul.f32 %v740, 1.442695
        %v743 = vpow.pop %v742
        %v744 = vmul.f32 %v741, 1.442695
        %v745 = vpow.pop %v744
        %v746 = vadd.f32 %v743, 1.0
        %v747 = vadd.f32 %v745, 1.0
        %v748 = vrcp.pop %v746
        %v749 = vrcp.pop %v747
        %750 = vst.msk [vmem:[%s434] sm:$0xff] %vm482, %v748
        %751 = vst.msk [vmem:[%s434 + $0x8] sm:$0xff] %vm482, %v749
        %s752 = sand.u32 %s313, 1
        %s753 = scalar_lea.sflag [#allocation3], %s752
        %s754 = sand.u32 %s313, 1
        %s755 = smul.addr %s754, 16
        %s756 = scalar_lea.vmem [#allocation2], %s755
        // Predicated region
        $region73: #{autoencoder_forward.1} parent=71 // pred_check
          %p757 = pneg %p323
        $region74: #{autoencoder_forward.1} parent=71 // pred_check_branch
          %759 = sbr.rel (%p757) target = $region76
        $region75: #{autoencoder_forward.1} parent=71 // pred_region
          %s760 = smul.u32 2, %s27
          %762 = vsyncadd %s753, 0
          %s763 = smul.addr %s760, 8
          %s764 = scalar_lea.hbm %s13, %s763
          %s765 = sshll.u32 %s756, 4
          %s766 = int_to_ptr.vmem [resolvable:$true] %s765
          %s767 = sshll.u32 %s764, 4
          %s768 = int_to_ptr.hbm [resolvable:$true] %s767
          %773 = dma.vmem_to_hbm [thread:$0]  %s766, 256, %s768, %s753, 128, 128, 8
        $region76: #{autoencoder_forward.1} parent=71 // pred_fallthru
          _
      $region72: #{autoencoder_forward.1} parent=5 // pred_fallthru
        _
      %p774 = scmp.le.s32.totalorder 2, %s22
      // Predicated region
      $region77: #{autoencoder_forward.1} parent=5 // pred_check
        %p775 = pneg %p774
      $region78: #{autoencoder_forward.1} parent=5 // pred_check_branch
        %777 = sbr.rel (%p775) target = $region80
      $region79: #{autoencoder_forward.1} parent=5 // pred_region
        %s778 = ssub.s32 %s22, 2
        // Predicated region
        $region81: #{autoencoder_forward.1} parent=79 // pred_check
          %p779 = pneg %p329
        $region82: #{autoencoder_forward.1} parent=79 // pred_check_branch
          %781 = sbr.rel (%p779) target = $region84
        $region83: #{autoencoder_forward.1} parent=79 // pred_region
          %s782 = sand.u32 %s314, 1
          %s783 = scalar_lea.sflag [#allocation3], %s782
          %s784 = sand.u32 %s314, 1
          %s785 = smul.addr %s784, 16
          %s786 = scalar_lea.vmem [#allocation2], %s785
          %788 = dma.done %s783, 256
        $region84: #{autoencoder_forward.1} parent=79 // pred_fallthru
          _
      $region80: #{autoencoder_forward.1} parent=5 // pred_fallthru
        _
    $region6: #{autoencoder_forward.1} parent=1 // loop_footer
      %s26 = sadd.s32 1, %s22
    $region7: #{autoencoder_forward.1} parent=1 // loop_footer_branch
      %21 = sbr.rel target = $region3
    $region8: #{autoencoder_forward.1} parent=1 // loop_exit
      _
    %789 = vsyncpa [#allocation3], 1
    %s790 = scalar_lea.sflag [#allocation3], 1
    %791 = vsyncpa %s790, 1

</llo_original>
